<compile_context>
chip_gen: v7x
topology: tpu7x:2x2x1
jax: 0.10.0
libtpu: 0.0.40
codegen_flags: <defaults>
</compile_context>

<pallas_src>
import jax
import jax.numpy as jnp
from jax.experimental import pallas as pl
from jax.experimental.pallas import tpu as pltpu


# --------------------------------------------------------------------------
# Kernel: fused windowed-DFT + power + mixup + mel + log for one tile of frames
# --------------------------------------------------------------------------
def _logmel_kernel(alpha_ref, fs_ref, ft_ref, csw_ref, mel_ref, o_ref):
    alpha = alpha_ref[0]
    nfreq = mel_ref.shape[0]          # = n_fft // 2 (Nyquist bin dropped)
    csw = csw_ref[...]                # (n_fft, 2*nfreq) bf16: [cos | sin]

    # fused windowed real-DFT for both mixup sources (bf16 MXU, f32 accumulate)
    ri_s = jnp.dot(fs_ref[...], csw, preferred_element_type=jnp.float32)
    ri_t = jnp.dot(ft_ref[...], csw, preferred_element_type=jnp.float32)

    # power spectra + mixup on power spectrograms (VPU); slices are 128-lane
    # aligned so they stay free.
    p_src = ri_s[:, :nfreq] * ri_s[:, :nfreq] + ri_s[:, nfreq:] * ri_s[:, nfreq:]
    p_tgt = ri_t[:, :nfreq] * ri_t[:, :nfreq] + ri_t[:, nfreq:] * ri_t[:, nfreq:]
    p_mix = p_src * (1.0 - alpha) + p_tgt * alpha

    # mel projection kept in f32 (module runs this matmul with autocast off)
    mel = jnp.dot(p_mix, mel_ref[...], preferred_element_type=jnp.float32)
    o_ref[...] = (jnp.log(mel + 1e-5) + 4.5) / 5.0


# --------------------------------------------------------------------------
# Parameter construction (deterministic, matches module __init__ semantics)
# --------------------------------------------------------------------------
def _kaldi_mel_banks(num_bins, n_fft, sr, low_freq, high_freq):
    # torchaudio.compliance.kaldi.get_mel_banks with vtln_warp_factor=1.0
    num_fft_bins = n_fft // 2
    nyquist = 0.5 * sr
    if high_freq <= 0.0:
        high_freq += nyquist
    fft_bin_width = sr / n_fft

    def mel(f):
        return 1127.0 * jnp.log(1.0 + f / 700.0)

    mel_low = mel(jnp.float32(low_freq))
    mel_high = mel(jnp.float32(high_freq))
    mel_delta = (mel_high - mel_low) / (num_bins + 1)

    b = jnp.arange(num_bins, dtype=jnp.float32)[:, None]
    left = mel_low + b * mel_delta
    center = mel_low + (b + 1.0) * mel_delta
    right = mel_low + (b + 2.0) * mel_delta

    freqs = fft_bin_width * jnp.arange(num_fft_bins, dtype=jnp.float32)[None, :]
    m = mel(freqs)
    up = (m - left) / (center - left)
    down = (right - m) / (right - center)
    return jnp.maximum(0.0, jnp.minimum(up, down))  # (num_bins, n_fft//2)


class AugmentMelSTFT2Pallas:
    def __init__(self, n_mels=64, sr=32000, win_length=200, hopsize=80,
                 n_fft=256, fmin=0.0, fmax=None,
                 fmin_aug_range=1, fmax_aug_range=1000, tile_m=512):
        assert fmin_aug_range >= 1 and fmax_aug_range >= 1
        assert n_fft % 256 == 0, "n_fft must be a multiple of 256 (lane tiling)"
        assert win_length <= n_fft
        self.n_mels, self.sr = n_mels, sr
        self.win_length, self.hopsize, self.n_fft = win_length, hopsize, n_fft
        self.tile_m = tile_m
        if fmax is None:
            fmax = sr // 2 - fmax_aug_range // 2
        self.fmin, self.fmax = float(fmin), float(fmax)
        # TODO(synk): training-time FrequencyMasking/TimeMasking and random
        # fmin/fmax augmentation are eval-mode no-ops; not implemented.

        # hann window (periodic=False), center-padded to n_fft as torch.stft does
        n = jnp.arange(win_length, dtype=jnp.float32)
        win = 0.5 - 0.5 * jnp.cos(2.0 * jnp.pi * n / (win_length - 1))
        lpad = (n_fft - win_length) // 2
        win_padded = jnp.pad(win, (lpad, n_fft - win_length - lpad))

        # windowed real-DFT matrices for bins k = 0 .. n_fft//2 - 1.
        # The Nyquist bin (k = n_fft//2) is dropped: its mel weight is the
        # zero column added by F.pad in the reference, so results are unchanged.
        self.n_freq = n_fft // 2                       # 128-lane aligned
        nn = jnp.arange(n_fft, dtype=jnp.float32)[:, None]
        kk = jnp.arange(self.n_freq, dtype=jnp.float32)[None, :]
        ang = 2.0 * jnp.pi * nn * kk / n_fft
        cosw = win_padded[:, None] * jnp.cos(ang)
        sinw = win_padded[:, None] * jnp.sin(ang)
        # fused [cos | sin] operand, bf16 for MXU throughput / half HBM bytes
        self.csw = jnp.concatenate([cosw, sinw], axis=1).astype(jnp.bfloat16)

        # kaldi mel filterbank, transposed for (N,F)@(F,M); output mel axis is
        # zero-padded to a multiple of 128 so stores are lane-dense (unmasked).
        self.m_pad = ((n_mels + 127) // 128) * 128
        mel = _kaldi_mel_banks(n_mels, n_fft, sr, self.fmin, self.fmax)
        melT = mel.T.astype(jnp.float32)               # (n_fft//2, n_mels)
        self.melT = jnp.pad(melT, ((0, 0), (0, self.m_pad - n_mels)))

    def _frame(self, x):
        # torch.stft(center=True, pad_mode='reflect') framing, done as glue
        b, t = x.shape
        pad = self.n_fft // 2
        xp = jnp.pad(x, ((0, 0), (pad, pad)), mode="reflect")
        n_frames = 1 + t // self.hopsize
        starts = jnp.arange(n_frames) * self.hopsize
        idx = starts[:, None] + jnp.arange(self.n_fft)[None, :]
        frames = xp[:, idx]  # (b, n_frames, n_fft)
        return frames.reshape(b * n_frames, self.n_fft), n_frames
        # TODO(synk): frames are a ~3.2x duplication of the waveform in HBM;
        # a manual pl.ANY + DMA span-fetch framing kernel would cut that.

    def __call__(self, x_src, x_tgt, alpha):
        b = x_src.shape[0]
        # preemphasis conv1d([[-0.97, 1]]) == x[:,1:] - 0.97*x[:,:-1]; plain
        # JAX so XLA fuses it with the reflect-pad/gather framing. Frames are
        # cast to bf16 for the DFT matmul (f32 accumulation in-kernel).
        xs = (x_src[:, 1:] - 0.97 * x_src[:, :-1]).astype(jnp.bfloat16)
        xt = (x_tgt[:, 1:] - 0.97 * x_tgt[:, :-1]).astype(jnp.bfloat16)
        fs, n_frames = self._frame(xs)
        ft, _ = self._frame(xt)

        n = fs.shape[0]
        # big M tiles keep the MXU fed; clamp (to a multiple of 8) for tiny inputs
        tm = min(self.tile_m, ((n + 7) // 8) * 8)
        n_pad = ((n + tm - 1) // tm) * tm
        fs = jnp.pad(fs, ((0, n_pad - n), (0, 0)))
        ft = jnp.pad(ft, ((0, n_pad - n), (0, 0)))
        alpha_arr = jnp.asarray(alpha, jnp.float32).reshape(1)

        out = pl.pallas_call(
            _logmel_kernel,
            out_shape=jax.ShapeDtypeStruct((n_pad, self.m_pad), jnp.float32),
            grid=(n_pad // tm,),
            in_specs=[
                pl.BlockSpec(memory_space=pltpu.MemorySpace.SMEM),             # alpha
                pl.BlockSpec((tm, self.n_fft), lambda i: (i, 0)),              # frames_src (bf16)
                pl.BlockSpec((tm, self.n_fft), lambda i: (i, 0)),              # frames_tgt (bf16)
                pl.BlockSpec((self.n_fft, 2 * self.n_freq), lambda i: (0, 0)),  # [cos|sin] DFT (bf16)
                pl.BlockSpec((self.n_freq, self.m_pad), lambda i: (0, 0)),     # mel^T (f32)
            ],
            out_specs=pl.BlockSpec((tm, self.m_pad), lambda i: (i, 0)),
            compiler_params=pltpu.CompilerParams(
                dimension_semantics=("parallel",)),
        )(alpha_arr, fs, ft, self.csw, self.melT)

        out = out[:n, :self.n_mels].reshape(b, n_frames, self.n_mels)
        return jnp.transpose(out, (0, 2, 1))  # (B, n_mels, n_frames)


if __name__ == "__main__":
    key = jax.random.PRNGKey(0)
    k1, k2 = jax.random.split(key)
    B, T = 2, 2560
    x_src = jax.random.normal(k1, (B, T), dtype=jnp.float32)
    x_tgt = jax.random.normal(k2, (B, T), dtype=jnp.float32)
    alpha = 0.3

    mod = AugmentMelSTFT2Pallas(n_mels=64, sr=32000, win_length=200,
                                hopsize=80, n_fft=256)
    out = mod(x_src, x_tgt, alpha)
    jax.block_until_ready(out)

    n_frames = 1 + (T - 1) // 80
    assert out.shape == (B, 64, n_frames), out.shape
    assert bool(jnp.all(jnp.isfinite(out)))
    print("KERNEL_OK")
</pallas_src>

<mosaic_0001>
module attributes {stable_mosaic.version = 11 : i64} {
  func.func @_logmel_kernel(%arg0: i32, %arg1: memref<1xf32, #tpu.memory_space<smem>>, %arg2: memref<64x256xbf16, #tpu.memory_space<vmem>>, %arg3: memref<64x256xbf16, #tpu.memory_space<vmem>>, %arg4: memref<256x256xbf16, #tpu.memory_space<vmem>>, %arg5: memref<128x128xf32, #tpu.memory_space<vmem>>, %arg6: memref<64x128xf32, #tpu.memory_space<vmem>>) attributes {dimension_semantics = [#tpu.dimension_semantics<parallel>], iteration_bounds = array<i64: 1>, scalar_prefetch = 0 : i64, scratch_operands = 0 : i64, tpu.core_type = #tpu.core_type<tc>, window_params = [{transform_indices = @transform_0, window_bounds = array<i64: 1>}, {transform_indices = @transform_1, window_bounds = array<i64: 64, 256>}, {transform_indices = @transform_2, window_bounds = array<i64: 64, 256>}, {pipeline_mode = #tpu.pipeline_mode<synchronous>, transform_indices = @transform_3, window_bounds = array<i64: 256, 256>}, {pipeline_mode = #tpu.pipeline_mode<synchronous>, transform_indices = @transform_4, window_bounds = array<i64: 128, 128>}, {transform_indices = @transform_5, window_bounds = array<i64: 64, 128>}]} {
    %c0 = arith.constant 0 : index
    %0 = memref.load %arg1[%c0] : memref<1xf32, #tpu.memory_space<smem>>
    %c0_0 = arith.constant 0 : index
    %c0_1 = arith.constant 0 : index
    %1 = vector.load %arg4[%c0_0, %c0_1] : memref<256x256xbf16, #tpu.memory_space<vmem>>, vector<256x256xbf16>
    %c0_2 = arith.constant 0 : index
    %c0_3 = arith.constant 0 : index
    %2 = vector.load %arg2[%c0_2, %c0_3] : memref<64x256xbf16, #tpu.memory_space<vmem>>, vector<64x256xbf16>
    %cst = arith.constant dense<0.000000e+00> : vector<64x256xf32>
    %3 = tpu.matmul %2, %1, %cst {dimension_numbers = #tpu.dot_dimension_numbers<[1], [0], [0], [1], [0, 0, 1, 1], [], []>} : vector<64x256xbf16>, vector<256x256xbf16>, vector<64x256xf32> -> vector<64x256xf32>
    %c0_4 = arith.constant 0 : index
    %c0_5 = arith.constant 0 : index
    %4 = vector.load %arg3[%c0_4, %c0_5] : memref<64x256xbf16, #tpu.memory_space<vmem>>, vector<64x256xbf16>
    %cst_6 = arith.constant dense<0.000000e+00> : vector<64x256xf32>
    %5 = tpu.matmul %4, %1, %cst_6 {dimension_numbers = #tpu.dot_dimension_numbers<[1], [0], [0], [1], [0, 0, 1, 1], [], []>} : vector<64x256xbf16>, vector<256x256xbf16>, vector<64x256xf32> -> vector<64x256xf32>
    %6 = vector.extract_strided_slice %3 {offsets = [0, 0], sizes = [64, 128], strides = [1, 1]} : vector<64x256xf32> to vector<64x128xf32>
    %7 = vector.extract_strided_slice %3 {offsets = [0, 0], sizes = [64, 128], strides = [1, 1]} : vector<64x256xf32> to vector<64x128xf32>
    %8 = arith.mulf %6, %7 : vector<64x128xf32>
    %9 = vector.extract_strided_slice %3 {offsets = [0, 128], sizes = [64, 128], strides = [1, 1]} : vector<64x256xf32> to vector<64x128xf32>
    %10 = vector.extract_strided_slice %3 {offsets = [0, 128], sizes = [64, 128], strides = [1, 1]} : vector<64x256xf32> to vector<64x128xf32>
    %11 = arith.mulf %9, %10 : vector<64x128xf32>
    %12 = arith.addf %8, %11 : vector<64x128xf32>
    %13 = vector.extract_strided_slice %5 {offsets = [0, 0], sizes = [64, 128], strides = [1, 1]} : vector<64x256xf32> to vector<64x128xf32>
    %14 = vector.extract_strided_slice %5 {offsets = [0, 0], sizes = [64, 128], strides = [1, 1]} : vector<64x256xf32> to vector<64x128xf32>
    %15 = arith.mulf %13, %14 : vector<64x128xf32>
    %16 = vector.extract_strided_slice %5 {offsets = [0, 128], sizes = [64, 128], strides = [1, 1]} : vector<64x256xf32> to vector<64x128xf32>
    %17 = vector.extract_strided_slice %5 {offsets = [0, 128], sizes = [64, 128], strides = [1, 1]} : vector<64x256xf32> to vector<64x128xf32>
    %18 = arith.mulf %16, %17 : vector<64x128xf32>
    %19 = arith.addf %15, %18 : vector<64x128xf32>
    %cst_7 = arith.constant 1.000000e+00 : f32
    %20 = arith.subf %cst_7, %0 : f32
    %21 = vector.broadcast %20 : f32 to vector<64x128xf32>
    %22 = arith.mulf %12, %21 : vector<64x128xf32>
    %23 = vector.broadcast %0 : f32 to vector<64x128xf32>
    %24 = arith.mulf %19, %23 : vector<64x128xf32>
    %25 = arith.addf %22, %24 : vector<64x128xf32>
    %c0_8 = arith.constant 0 : index
    %c0_9 = arith.constant 0 : index
    %26 = vector.load %arg5[%c0_8, %c0_9] : memref<128x128xf32, #tpu.memory_space<vmem>>, vector<128x128xf32>
    %cst_10 = arith.constant dense<0.000000e+00> : vector<64x128xf32>
    %27 = tpu.matmul %25, %26, %cst_10 {dimension_numbers = #tpu.dot_dimension_numbers<[1], [0], [0], [1], [0, 0, 1, 1], [], []>} : vector<64x128xf32>, vector<128x128xf32>, vector<64x128xf32> -> vector<64x128xf32>
    %cst_11 = arith.constant 9.99999974E-6 : f32
    %28 = vector.broadcast %cst_11 : f32 to vector<64x128xf32>
    %29 = arith.addf %27, %28 : vector<64x128xf32>
    %30 = math.log %29 : vector<64x128xf32>
    %cst_12 = arith.constant 4.500000e+00 : f32
    %31 = vector.broadcast %cst_12 : f32 to vector<64x128xf32>
    %32 = arith.addf %30, %31 : vector<64x128xf32>
    %cst_13 = arith.constant 5.000000e+00 : f32
    %33 = vector.broadcast %cst_13 : f32 to vector<64x128xf32>
    %34 = arith.divf %32, %33 : vector<64x128xf32>
    %c0_14 = arith.constant 0 : index
    %c0_15 = arith.constant 0 : index
    %35 = vector.load %arg6[%c0_14, %c0_15] : memref<64x128xf32, #tpu.memory_space<vmem>>, vector<64x128xf32>
    tpu.vector_store %arg6[%c0_14, %c0_15], %34 {strides = array<i32>} : memref<64x128xf32, #tpu.memory_space<vmem>>, vector<64x128xf32>,
    return
  }
  func.func @transform_0(%arg0: i32) -> i32 {
    %c0_i32 = arith.constant 0 : i32
    %c0_i32_0 = arith.constant 0 : i32
    return %c0_i32 : i32
  }
  func.func @transform_1(%arg0: i32) -> (i32, i32) {
    %c0_i32 = arith.constant 0 : i32
    %c0_i32_0 = arith.constant 0 : i32
    return %arg0, %c0_i32 : i32, i32
  }
  func.func @transform_2(%arg0: i32) -> (i32, i32) {
    %c0_i32 = arith.constant 0 : i32
    %c0_i32_0 = arith.constant 0 : i32
    return %arg0, %c0_i32 : i32, i32
  }
  func.func @transform_3(%arg0: i32) -> (i32, i32) {
    %c0_i32 = arith.constant 0 : i32
    %c0_i32_0 = arith.constant 0 : i32
    %c0_i32_1 = arith.constant 0 : i32
    return %c0_i32, %c0_i32_0 : i32, i32
  }
  func.func @transform_4(%arg0: i32) -> (i32, i32) {
    %c0_i32 = arith.constant 0 : i32
    %c0_i32_0 = arith.constant 0 : i32
    %c0_i32_1 = arith.constant 0 : i32
    return %c0_i32, %c0_i32_0 : i32, i32
  }
  func.func @transform_5(%arg0: i32) -> (i32, i32) {
    %c0_i32 = arith.constant 0 : i32
    %c0_i32_0 = arith.constant 0 : i32
    return %arg0, %c0_i32 : i32, i32
  }
}

</mosaic_0001>

<llo_original>
// kernel: tpu_custom_call.1
$region0: #{tpu_custom_call.1}
  #allocation0 [shape = 'u32[]', space=smem, size = 0x4, offset = 0x4, fixed_abs, tag = 'smem constant byte address 0x4 - core index']
  #allocation1 [shape = 'u32[144,128]{1,0:T(1,128)}', space=vmem, size = 0x12000, scoped, tag = 'internal scratch']
  #allocation2 [shape = 'f32[1]{0:T(128)S(6)}', space=smem, size = 0x200, scoped, tag = 'scoped memory for tpu_custom_call.1']
  %s0 = inlined_call_operand.<no memory space> [shape: f32[1], index: 0, kind: input, shape index: {}]
  %s1 = inlined_call_operand.hbm [shape: bf16[64,256], index: 1, kind: input, shape index: {}]
  %s2 = inlined_call_operand.hbm [shape: bf16[64,256], index: 2, kind: input, shape index: {}]
  %s3 = inlined_call_operand.hbm [shape: bf16[256,256], index: 3, kind: input, shape index: {}]
  %s4 = inlined_call_operand.hbm [shape: f32[128,128], index: 4, kind: input, shape index: {}]
  %s5 = inlined_call_operand.hbm [shape: f32[64,128], index: 5, kind: output, shape index: {}]
  %s6 = sld [smem:[#allocation0]]
  $region46: #{tpu_custom_call.1} parent=0
    _
  %s8 = ssub.s32 1, %s6
  %s9 = scalar_select 0, %s8, %s6
  %10 = sst [smem:[#allocation2]] %s0
  $region1: #{tpu_custom_call.1} parent=0
    #allocation3 [shape = 'u8[32768]{0}', space=vmem, size = 0x8000, scoped, tag = 'input window, operand 1, single buffered']
    #allocation4 [shape = 's32[1]{0}', space=sflag, size = 0x4, scoped, tag = 'scoped memory for tpu_custom_call.1']
    #allocation5 [shape = 's32[1]{0}', space=sflag, size = 0x4, scoped, tag = 'scoped memory for tpu_custom_call.1']
    #allocation6 [shape = 'u8[32768]{0}', space=vmem, size = 0x8000, scoped, tag = 'input window, operand 2, single buffered']
    #allocation7 [shape = 's32[1]{0}', space=sflag, size = 0x4, scoped, tag = 'scoped memory for tpu_custom_call.1']
    #allocation8 [shape = 'u8[131072]{0}', space=vmem, size = 0x20000, scoped, tag = 'input window, operand 3, single buffered']
    #allocation9 [shape = 'u8[65536]{0}', space=vmem, size = 0x10000, scoped, tag = 'input window, operand 4, single buffered']
    #allocation10 [shape = 's32[1]{0}', space=sflag, size = 0x4, scoped, tag = 'scoped memory for tpu_custom_call.1']
    #allocation11 [shape = 'u8[32768]{0}', space=vmem, size = 0x8000, scoped, tag = 'output window, operand 0, single buffered']
    %11 = vsyncpa [#allocation4], 0
    %12 = vsyncpa [#allocation7], 0
    %13 = vsyncpa [#allocation10], 0
    %14 = vsyncpa [#allocation5], 0
    // Predicated region
    $region2: #{tpu_custom_call.1} parent=1 // pred_check
      _
    $region3: #{tpu_custom_call.1} parent=1 // pred_check_branch
      %16 = sbr.rel (0) target = $region5
    $region4: #{tpu_custom_call.1} parent=1 // pred_region
      _
    $region5: #{tpu_custom_call.1} parent=1 // pred_fallthru
      _
    // Predicated region
    $region6: #{tpu_custom_call.1} parent=1 // pred_check
      _
    $region7: #{tpu_custom_call.1} parent=1 // pred_check_branch
      %18 = sbr.rel (0) target = $region9
    $region8: #{tpu_custom_call.1} parent=1 // pred_region
      %s20 = ssub.s32 1024, 1024
      %21 = vsyncadd [#allocation4], %s20
      %s22 = sshll.u32 [#allocation3], 4
      %s23 = int_to_ptr.vmem [resolvable:$true] %s22
      %28 = dma.hbm_to_vmem [thread:$0]  %s1, 1024, %s23, [#allocation4], 128, 128, 8
    $region9: #{tpu_custom_call.1} parent=1 // pred_fallthru
      _
    // Predicated region
    $region10: #{tpu_custom_call.1} parent=1 // pred_check
      _
    $region11: #{tpu_custom_call.1} parent=1 // pred_check_branch
      %30 = sbr.rel (0) target = $region13
    $region12: #{tpu_custom_call.1} parent=1 // pred_region
      %s32 = ssub.s32 1024, 1024
      %33 = vsyncadd [#allocation7], %s32
      %s34 = sshll.u32 [#allocation6], 4
      %s35 = int_to_ptr.vmem [resolvable:$true] %s34
      %40 = dma.hbm_to_vmem [thread:$0]  %s2, 1024, %s35, [#allocation7], 128, 128, 8
    $region13: #{tpu_custom_call.1} parent=1 // pred_fallthru
      _
    // Predicated region
    $region14: #{tpu_custom_call.1} parent=1 // pred_check
      _
    $region15: #{tpu_custom_call.1} parent=1 // pred_check_branch
      %42 = sbr.rel (0) target = $region17
    $region16: #{tpu_custom_call.1} parent=1 // pred_region
      %s44 = ssub.s32 4096, 4096
      %45 = vsyncadd [#allocation7], %s44
      %s46 = sshll.u32 [#allocation8], 4
      %s47 = int_to_ptr.vmem [resolvable:$true] %s46
      %52 = dma.hbm_to_vmem [thread:$0]  %s3, 4096, %s47, [#allocation7], 128, 128, 8
    $region17: #{tpu_custom_call.1} parent=1 // pred_fallthru
      _
    // Predicated region
    $region18: #{tpu_custom_call.1} parent=1 // pred_check
      _
    $region19: #{tpu_custom_call.1} parent=1 // pred_check_branch
      %54 = sbr.rel (0) target = $region21
    $region20: #{tpu_custom_call.1} parent=1 // pred_region
      %s56 = ssub.s32 2048, 2048
      %57 = vsyncadd [#allocation10], %s56
      %s58 = sshll.u32 [#allocation9], 4
      %s59 = int_to_ptr.vmem [resolvable:$true] %s58
      %64 = dma.hbm_to_vmem [thread:$0]  %s4, 2048, %s59, [#allocation10], 128, 128, 8
    $region21: #{tpu_custom_call.1} parent=1 // pred_fallthru
      _
    // Predicated region
    $region22: #{tpu_custom_call.1} parent=1 // pred_check
      _
    $region23: #{tpu_custom_call.1} parent=1 // pred_check_branch
      %66 = sbr.rel (0) target = $region25
    $region24: #{tpu_custom_call.1} parent=1 // pred_region
      %67 = dma.done [#allocation4], 1024
    $region25: #{tpu_custom_call.1} parent=1 // pred_fallthru
      _
    // Predicated region
    $region26: #{tpu_custom_call.1} parent=1 // pred_check
      _
    $region27: #{tpu_custom_call.1} parent=1 // pred_check_branch
      %69 = sbr.rel (0) target = $region29
    $region28: #{tpu_custom_call.1} parent=1 // pred_region
      %70 = dma.done [#allocation7], 1024
    $region29: #{tpu_custom_call.1} parent=1 // pred_fallthru
      _
    // Predicated region
    $region30: #{tpu_custom_call.1} parent=1 // pred_check
      _
    $region31: #{tpu_custom_call.1} parent=1 // pred_check_branch
      %72 = sbr.rel (0) target = $region33
    $region32: #{tpu_custom_call.1} parent=1 // pred_region
      %73 = dma.done [#allocation7], 4096
    $region33: #{tpu_custom_call.1} parent=1 // pred_fallthru
      _
    // Predicated region
    $region34: #{tpu_custom_call.1} parent=1 // pred_check
      _
    $region35: #{tpu_custom_call.1} parent=1 // pred_check_branch
      %75 = sbr.rel (0) target = $region37
    $region36: #{tpu_custom_call.1} parent=1 // pred_region
      %76 = dma.done [#allocation10], 2048
    $region37: #{tpu_custom_call.1} parent=1 // pred_fallthru
      _
    %s77 = sld [smem:[#allocation2]]
    %v78 = vld [vmem:[#allocation8] sm:$0xff]
    %v79 = vld [vmem:[#allocation8 + $0x8] sm:$0xff]
    %v80 = vld [vmem:[#allocation8 + $0x10] sm:$0xff]
    %v81 = vld [vmem:[#allocation8 + $0x18] sm:$0xff]
    %v82 = vld [vmem:[#allocation8 + $0x20] sm:$0xff]
    %v83 = vld [vmem:[#allocation8 + $0x28] sm:$0xff]
    %v84 = vld [vmem:[#allocation8 + $0x30] sm:$0xff]
    %v85 = vld [vmem:[#allocation8 + $0x38] sm:$0xff]
    %v86 = vld [vmem:[#allocation8 + $0x40] sm:$0xff]
    %v87 = vld [vmem:[#allocation8 + $0x48] sm:$0xff]
    %v88 = vld [vmem:[#allocation8 + $0x50] sm:$0xff]
    %v89 = vld [vmem:[#allocation8 + $0x58] sm:$0xff]
    %v90 = vld [vmem:[#allocation8 + $0x60] sm:$0xff]
    %v91 = vld [vmem:[#allocation8 + $0x68] sm:$0xff]
    %v92 = vld [vmem:[#allocation8 + $0x70] sm:$0xff]
    %v93 = vld [vmem:[#allocation8 + $0x78] sm:$0xff]
    %v94 = vld [vmem:[#allocation8 + $0x80] sm:$0xff]
    %v95 = vld [vmem:[#allocation8 + $0x88] sm:$0xff]
    %v96 = vld [vmem:[#allocation8 + $0x90] sm:$0xff]
    %v97 = vld [vmem:[#allocation8 + $0x98] sm:$0xff]
    %v98 = vld [vmem:[#allocation8 + $0xa0] sm:$0xff]
    %v99 = vld [vmem:[#allocation8 + $0xa8] sm:$0xff]
    %v100 = vld [vmem:[#allocation8 + $0xb0] sm:$0xff]
    %v101 = vld [vmem:[#allocation8 + $0xb8] sm:$0xff]
    %v102 = vld [vmem:[#allocation8 + $0xc0] sm:$0xff]
    %v103 = vld [vmem:[#allocation8 + $0xc8] sm:$0xff]
    %v104 = vld [vmem:[#allocation8 + $0xd0] sm:$0xff]
    %v105 = vld [vmem:[#allocation8 + $0xd8] sm:$0xff]
    %v106 = vld [vmem:[#allocation8 + $0xe0] sm:$0xff]
    %v107 = vld [vmem:[#allocation8 + $0xe8] sm:$0xff]
    %v108 = vld [vmem:[#allocation8 + $0xf0] sm:$0xff]
    %v109 = vld [vmem:[#allocation8 + $0xf8] sm:$0xff]
    %v110 = vld [vmem:[#allocation3] sm:$0xff]
    %v111 = vld [vmem:[#allocation3 + $0x8] sm:$0xff]
    %v112 = vld [vmem:[#allocation3 + $0x10] sm:$0xff]
    %v113 = vld [vmem:[#allocation3 + $0x18] sm:$0xff]
    %v114 = vld [vmem:[#allocation3 + $0x20] sm:$0xff]
    %v115 = vld [vmem:[#allocation3 + $0x28] sm:$0xff]
    %v116 = vld [vmem:[#allocation3 + $0x30] sm:$0xff]
    %v117 = vld [vmem:[#allocation3 + $0x38] sm:$0xff]
    %v126 = vunpack.c.l.b16 %v110
    %v127 = vunpack.c.h.b16 %v110
    %v128 = vunpack.c.l.b16 %v111
    %v129 = vunpack.c.h.b16 %v111
    %v130 = vunpack.c.l.b16 %v112
    %v131 = vunpack.c.h.b16 %v112
    %v132 = vunpack.c.l.b16 %v113
    %v133 = vunpack.c.h.b16 %v113
    %v134 = vunpack.c.l.b16 %v114
    %v135 = vunpack.c.h.b16 %v114
    %v136 = vunpack.c.l.b16 %v115
    %v137 = vunpack.c.h.b16 %v115
    %v138 = vunpack.c.l.b16 %v116
    %v139 = vunpack.c.h.b16 %v116
    %v140 = vunpack.c.l.b16 %v117
    %v141 = vunpack.c.h.b16 %v117
    %v142 = vpack.c.b16 %v128, %v126
    %v143 = vpack.c.b16 %v129, %v127
    %v144 = vpack.c.b16 %v132, %v130
    %v145 = vpack.c.b16 %v133, %v131
    %v146 = vpack.c.b16 %v136, %v134
    %v147 = vpack.c.b16 %v137, %v135
    %v148 = vpack.c.b16 %v140, %v138
    %v149 = vpack.c.b16 %v141, %v139
    %v190 = vunpack.c.l.b16 %v78
    %v191 = vunpack.c.h.b16 %v78
    %v192 = vunpack.c.l.b16 %v79
    %v193 = vunpack.c.h.b16 %v79
    %v194 = vunpack.c.l.b16 %v80
    %v195 = vunpack.c.h.b16 %v80
    %v196 = vunpack.c.l.b16 %v81
    %v197 = vunpack.c.h.b16 %v81
    %v198 = vunpack.c.l.b16 %v82
    %v199 = vunpack.c.h.b16 %v82
    %v200 = vunpack.c.l.b16 %v83
    %v201 = vunpack.c.h.b16 %v83
    %v202 = vunpack.c.l.b16 %v84
    %v203 = vunpack.c.h.b16 %v84
    %v204 = vunpack.c.l.b16 %v85
    %v205 = vunpack.c.h.b16 %v85
    %v206 = vunpack.c.l.b16 %v86
    %v207 = vunpack.c.h.b16 %v86
    %v208 = vunpack.c.l.b16 %v87
    %v209 = vunpack.c.h.b16 %v87
    %v210 = vunpack.c.l.b16 %v88
    %v211 = vunpack.c.h.b16 %v88
    %v212 = vunpack.c.l.b16 %v89
    %v213 = vunpack.c.h.b16 %v89
    %v214 = vunpack.c.l.b16 %v90
    %v215 = vunpack.c.h.b16 %v90
    %v216 = vunpack.c.l.b16 %v91
    %v217 = vunpack.c.h.b16 %v91
    %v218 = vunpack.c.l.b16 %v92
    %v219 = vunpack.c.h.b16 %v92
    %v220 = vunpack.c.l.b16 %v93
    %v221 = vunpack.c.h.b16 %v93
    %v222 = vunpack.c.l.b16 %v94
    %v223 = vunpack.c.h.b16 %v94
    %v224 = vunpack.c.l.b16 %v95
    %v225 = vunpack.c.h.b16 %v95
    %v226 = vunpack.c.l.b16 %v96
    %v227 = vunpack.c.h.b16 %v96
    %v228 = vunpack.c.l.b16 %v97
    %v229 = vunpack.c.h.b16 %v97
    %v230 = vunpack.c.l.b16 %v98
    %v231 = vunpack.c.h.b16 %v98
    %v232 = vunpack.c.l.b16 %v99
    %v233 = vunpack.c.h.b16 %v99
    %v234 = vunpack.c.l.b16 %v100
    %v235 = vunpack.c.h.b16 %v100
    %v236 = vunpack.c.l.b16 %v101
    %v237 = vunpack.c.h.b16 %v101
    %v238 = vunpack.c.l.b16 %v102
    %v239 = vunpack.c.h.b16 %v102
    %v240 = vunpack.c.l.b16 %v103
    %v241 = vunpack.c.h.b16 %v103
    %v242 = vunpack.c.l.b16 %v104
    %v243 = vunpack.c.h.b16 %v104
    %v244 = vunpack.c.l.b16 %v105
    %v245 = vunpack.c.h.b16 %v105
    %v246 = vunpack.c.l.b16 %v106
    %v247 = vunpack.c.h.b16 %v106
    %v248 = vunpack.c.l.b16 %v107
    %v249 = vunpack.c.h.b16 %v107
    %v250 = vunpack.c.l.b16 %v108
    %v251 = vunpack.c.h.b16 %v108
    %v252 = vunpack.c.l.b16 %v109
    %v253 = vunpack.c.h.b16 %v109
    %v254 = vpack.c.b16 %v192, %v190
    %v255 = vpack.c.b16 %v193, %v191
    %v256 = vpack.c.b16 %v196, %v194
    %v257 = vpack.c.b16 %v197, %v195
    %v258 = vpack.c.b16 %v200, %v198
    %v259 = vpack.c.b16 %v201, %v199
    %v260 = vpack.c.b16 %v204, %v202
    %v261 = vpack.c.b16 %v205, %v203
    %v262 = vpack.c.b16 %v208, %v206
    %v263 = vpack.c.b16 %v209, %v207
    %v264 = vpack.c.b16 %v212, %v210
    %v265 = vpack.c.b16 %v213, %v211
    %v266 = vpack.c.b16 %v216, %v214
    %v267 = vpack.c.b16 %v217, %v215
    %v268 = vpack.c.b16 %v220, %v218
    %v269 = vpack.c.b16 %v221, %v219
    %v270 = vpack.c.b16 %v224, %v222
    %v271 = vpack.c.b16 %v225, %v223
    %v272 = vpack.c.b16 %v228, %v226
    %v273 = vpack.c.b16 %v229, %v227
    %v274 = vpack.c.b16 %v232, %v230
    %v275 = vpack.c.b16 %v233, %v231
    %v276 = vpack.c.b16 %v236, %v234
    %v277 = vpack.c.b16 %v237, %v235
    %v278 = vpack.c.b16 %v240, %v238
    %v279 = vpack.c.b16 %v241, %v239
    %v280 = vpack.c.b16 %v244, %v242
    %v281 = vpack.c.b16 %v245, %v243
    %v282 = vpack.c.b16 %v248, %v246
    %v283 = vpack.c.b16 %v249, %v247
    %v284 = vpack.c.b16 %v252, %v250
    %v285 = vpack.c.b16 %v253, %v251
    %318 = vmatprep.subr.bf16.mxu0 %v255
    %319 = vmatpush1.bf16.msra.mxu0 %v254
    %320 = vmatprep.subr.bf16.mxu0 %v257
    %321 = vmatpush1.bf16.msra.mxu0 %v256
    %322 = vmatprep.subr.bf16.mxu0 %v259
    %323 = vmatpush1.bf16.msra.mxu0 %v258
    %324 = vmatprep.subr.bf16.mxu0 %v261
    %325 = vmatpush1.bf16.msra.mxu0 %v260
    %326 = vmatprep.subr.bf16.mxu0 %v263
    %327 = vmatpush1.bf16.msra.mxu0 %v262
    %328 = vmatprep.subr.bf16.mxu0 %v265
    %329 = vmatpush1.bf16.msra.mxu0 %v264
    %330 = vmatprep.subr.bf16.mxu0 %v267
    %331 = vmatpush1.bf16.msra.mxu0 %v266
    %332 = vmatprep.subr.bf16.mxu0 %v269
    %333 = vmatpush1.bf16.msra.mxu0 %v268
    %334 = vmatprep.subr.bf16.mxu0 %v271
    %335 = vmatpush1.bf16.msra.mxu0 %v270
    %336 = vmatprep.subr.bf16.mxu0 %v273
    %337 = vmatpush1.bf16.msra.mxu0 %v272
    %338 = vmatprep.subr.bf16.mxu0 %v275
    %339 = vmatpush1.bf16.msra.mxu0 %v274
    %340 = vmatprep.subr.bf16.mxu0 %v277
    %341 = vmatpush1.bf16.msra.mxu0 %v276
    %342 = vmatprep.subr.bf16.mxu0 %v279
    %343 = vmatpush1.bf16.msra.mxu0 %v278
    %344 = vmatprep.subr.bf16.mxu0 %v281
    %345 = vmatpush1.bf16.msra.mxu0 %v280
    %346 = vmatprep.subr.bf16.mxu0 %v283
    %347 = vmatpush1.bf16.msra.mxu0 %v282
    %348 = vmatprep.subr.bf16.mxu0 %v285
    %349 = vmatpush1.bf16.msra.mxu0 %v284
    %350 = vmatprep.mubr.bf16.mxu0 %v143
    %351 = vmatmul.mubr.bf16.gmra.mrb[0].mxu0 %v142
    %v352 = vpop.f32.mrb[0].mxu0
    %v353 = vadd.f32 0.0, %v352
    %v354 = vpop.f32.mrb[0].mxu0
    %v355 = vadd.f32 0.0, %v354
    %v356 = vpop.f32.mrb[0].mxu0
    %v357 = vadd.f32 0.0, %v356
    %v358 = vpop.f32.mrb[0].mxu0
    %v359 = vadd.f32 0.0, %v358
    %360 = vmatprep.mubr.bf16.mxu0 %v145
    %361 = vmatmul.mubr.bf16.gmra.mrb[0].mxu0 %v144
    %v362 = vpop.f32.mrb[0].mxu0
    %v363 = vadd.f32 0.0, %v362
    %v364 = vpop.f32.mrb[0].mxu0
    %v365 = vadd.f32 0.0, %v364
    %v366 = vpop.f32.mrb[0].mxu0
    %v367 = vadd.f32 0.0, %v366
    %v368 = vpop.f32.mrb[0].mxu0
    %v369 = vadd.f32 0.0, %v368
    %370 = vmatprep.mubr.bf16.mxu0 %v147
    %371 = vmatmul.mubr.bf16.gmra.mrb[0].mxu0 %v146
    %v372 = vpop.f32.mrb[0].mxu0
    %v373 = vadd.f32 0.0, %v372
    %v374 = vpop.f32.mrb[0].mxu0
    %v375 = vadd.f32 0.0, %v374
    %v376 = vpop.f32.mrb[0].mxu0
    %v377 = vadd.f32 0.0, %v376
    %v378 = vpop.f32.mrb[0].mxu0
    %v379 = vadd.f32 0.0, %v378
    %380 = vmatprep.mubr.bf16.mxu0 %v149
    %381 = vmatmul.mubr.bf16.gmra.mrb[0].mxu0 %v148
    %v382 = vpop.f32.mrb[0].mxu0
    %v383 = vadd.f32 0.0, %v382
    %v384 = vpop.f32.mrb[0].mxu0
    %v385 = vadd.f32 0.0, %v384
    %v386 = vpop.f32.mrb[0].mxu0
    %v387 = vadd.f32 0.0, %v386
    %v388 = vpop.f32.mrb[0].mxu0
    %v389 = vadd.f32 0.0, %v388
    %390 = vdwg.mxu0
    %v391 = vld [vmem:[#allocation6] sm:$0xff]
    %v392 = vld [vmem:[#allocation6 + $0x8] sm:$0xff]
    %v393 = vld [vmem:[#allocation6 + $0x10] sm:$0xff]
    %v394 = vld [vmem:[#allocation6 + $0x18] sm:$0xff]
    %v395 = vld [vmem:[#allocation6 + $0x20] sm:$0xff]
    %v396 = vld [vmem:[#allocation6 + $0x28] sm:$0xff]
    %v397 = vld [vmem:[#allocation6 + $0x30] sm:$0xff]
    %v398 = vld [vmem:[#allocation6 + $0x38] sm:$0xff]
    %v407 = vunpack.c.l.b16 %v391
    %v408 = vunpack.c.h.b16 %v391
    %v409 = vunpack.c.l.b16 %v392
    %v410 = vunpack.c.h.b16 %v392
    %v411 = vunpack.c.l.b16 %v393
    %v412 = vunpack.c.h.b16 %v393
    %v413 = vunpack.c.l.b16 %v394
    %v414 = vunpack.c.h.b16 %v394
    %v415 = vunpack.c.l.b16 %v395
    %v416 = vunpack.c.h.b16 %v395
    %v417 = vunpack.c.l.b16 %v396
    %v418 = vunpack.c.h.b16 %v396
    %v419 = vunpack.c.l.b16 %v397
    %v420 = vunpack.c.h.b16 %v397
    %v421 = vunpack.c.l.b16 %v398
    %v422 = vunpack.c.h.b16 %v398
    %v423 = vpack.c.b16 %v409, %v407
    %v424 = vpack.c.b16 %v410, %v408
    %v425 = vpack.c.b16 %v413, %v411
    %v426 = vpack.c.b16 %v414, %v412
    %v427 = vpack.c.b16 %v417, %v415
    %v428 = vpack.c.b16 %v418, %v416
    %v429 = vpack.c.b16 %v421, %v419
    %v430 = vpack.c.b16 %v422, %v420
    %439 = vmatprep.subr.bf16.mxu0 %v255
    %440 = vmatpush1.bf16.msra.mxu0 %v254
    %441 = vmatprep.subr.bf16.mxu0 %v257
    %442 = vmatpush1.bf16.msra.mxu0 %v256
    %443 = vmatprep.subr.bf16.mxu0 %v259
    %444 = vmatpush1.bf16.msra.mxu0 %v258
    %445 = vmatprep.subr.bf16.mxu0 %v261
    %446 = vmatpush1.bf16.msra.mxu0 %v260
    %447 = vmatprep.subr.bf16.mxu0 %v263
    %448 = vmatpush1.bf16.msra.mxu0 %v262
    %449 = vmatprep.subr.bf16.mxu0 %v265
    %450 = vmatpush1.bf16.msra.mxu0 %v264
    %451 = vmatprep.subr.bf16.mxu0 %v267
    %452 = vmatpush1.bf16.msra.mxu0 %v266
    %453 = vmatprep.subr.bf16.mxu0 %v269
    %454 = vmatpush1.bf16.msra.mxu0 %v268
    %455 = vmatprep.subr.bf16.mxu0 %v271
    %456 = vmatpush1.bf16.msra.mxu0 %v270
    %457 = vmatprep.subr.bf16.mxu0 %v273
    %458 = vmatpush1.bf16.msra.mxu0 %v272
    %459 = vmatprep.subr.bf16.mxu0 %v275
    %460 = vmatpush1.bf16.msra.mxu0 %v274
    %461 = vmatprep.subr.bf16.mxu0 %v277
    %462 = vmatpush1.bf16.msra.mxu0 %v276
    %463 = vmatprep.subr.bf16.mxu0 %v279
    %464 = vmatpush1.bf16.msra.mxu0 %v278
    %465 = vmatprep.subr.bf16.mxu0 %v281
    %466 = vmatpush1.bf16.msra.mxu0 %v280
    %467 = vmatprep.subr.bf16.mxu0 %v283
    %468 = vmatpush1.bf16.msra.mxu0 %v282
    %469 = vmatprep.subr.bf16.mxu0 %v285
    %470 = vmatpush1.bf16.msra.mxu0 %v284
    %471 = vmatprep.mubr.bf16.mxu0 %v424
    %472 = vmatmul.mubr.bf16.gmra.mrb[0].mxu0 %v423
    %v473 = vpop.f32.mrb[0].mxu0
    %v474 = vadd.f32 0.0, %v473
    %v475 = vpop.f32.mrb[0].mxu0
    %v476 = vadd.f32 0.0, %v475
    %v477 = vpop.f32.mrb[0].mxu0
    %v478 = vadd.f32 0.0, %v477
    %v479 = vpop.f32.mrb[0].mxu0
    %v480 = vadd.f32 0.0, %v479
    %481 = vmatprep.mubr.bf16.mxu0 %v426
    %482 = vmatmul.mubr.bf16.gmra.mrb[0].mxu0 %v425
    %v483 = vpop.f32.mrb[0].mxu0
    %v484 = vadd.f32 0.0, %v483
    %v485 = vpop.f32.mrb[0].mxu0
    %v486 = vadd.f32 0.0, %v485
    %v487 = vpop.f32.mrb[0].mxu0
    %v488 = vadd.f32 0.0, %v487
    %v489 = vpop.f32.mrb[0].mxu0
    %v490 = vadd.f32 0.0, %v489
    %491 = vmatprep.mubr.bf16.mxu0 %v428
    %492 = vmatmul.mubr.bf16.gmra.mrb[0].mxu0 %v427
    %v493 = vpop.f32.mrb[0].mxu0
    %v494 = vadd.f32 0.0, %v493
    %v495 = vpop.f32.mrb[0].mxu0
    %v496 = vadd.f32 0.0, %v495
    %v497 = vpop.f32.mrb[0].mxu0
    %v498 = vadd.f32 0.0, %v497
    %v499 = vpop.f32.mrb[0].mxu0
    %v500 = vadd.f32 0.0, %v499
    %501 = vmatprep.mubr.bf16.mxu0 %v430
    %502 = vmatmul.mubr.bf16.gmra.mrb[0].mxu0 %v429
    %v503 = vpop.f32.mrb[0].mxu0
    %v504 = vadd.f32 0.0, %v503
    %v505 = vpop.f32.mrb[0].mxu0
    %v506 = vadd.f32 0.0, %v505
    %v507 = vpop.f32.mrb[0].mxu0
    %v508 = vadd.f32 0.0, %v507
    %v509 = vpop.f32.mrb[0].mxu0
    %v510 = vadd.f32 0.0, %v509
    %511 = vdwg.mxu0
    %v512 = vmul.f32 %v353, %v353
    %v513 = vmul.f32 %v357, %v357
    %v514 = vmul.f32 %v363, %v363
    %v515 = vmul.f32 %v367, %v367
    %v516 = vmul.f32 %v373, %v373
    %v517 = vmul.f32 %v377, %v377
    %v518 = vmul.f32 %v383, %v383
    %v519 = vmul.f32 %v387, %v387
    %v520 = vmul.f32 %v355, %v355
    %v521 = vmul.f32 %v359, %v359
    %v522 = vmul.f32 %v365, %v365
    %v523 = vmul.f32 %v369, %v369
    %v524 = vmul.f32 %v375, %v375
    %v525 = vmul.f32 %v379, %v379
    %v526 = vmul.f32 %v385, %v385
    %v527 = vmul.f32 %v389, %v389
    %v528 = vadd.f32 %v512, %v520
    %v529 = vadd.f32 %v513, %v521
    %v530 = vadd.f32 %v514, %v522
    %v531 = vadd.f32 %v515, %v523
    %v532 = vadd.f32 %v516, %v524
    %v533 = vadd.f32 %v517, %v525
    %v534 = vadd.f32 %v518, %v526
    %v535 = vadd.f32 %v519, %v527
    %v536 = vmul.f32 %v474, %v474
    %v537 = vmul.f32 %v478, %v478
    %v538 = vmul.f32 %v484, %v484
    %v539 = vmul.f32 %v488, %v488
    %v540 = vmul.f32 %v494, %v494
    %v541 = vmul.f32 %v498, %v498
    %v542 = vmul.f32 %v504, %v504
    %v543 = vmul.f32 %v508, %v508
    %v544 = vmul.f32 %v476, %v476
    %v545 = vmul.f32 %v480, %v480
    %v546 = vmul.f32 %v486, %v486
    %v547 = vmul.f32 %v490, %v490
    %v548 = vmul.f32 %v496, %v496
    %v549 = vmul.f32 %v500, %v500
    %v550 = vmul.f32 %v506, %v506
    %v551 = vmul.f32 %v510, %v510
    %v552 = vadd.f32 %v536, %v544
    %v553 = vadd.f32 %v537, %v545
    %v554 = vadd.f32 %v538, %v546
    %v555 = vadd.f32 %v539, %v547
    %v556 = vadd.f32 %v540, %v548
    %v557 = vadd.f32 %v541, %v549
    %v558 = vadd.f32 %v542, %v550
    %v559 = vadd.f32 %v543, %v551
    %s560 = ssub.f32 1.0, %s77
    %v561 = vstv %s560
    %v562 = vmul.f32 %v528, %v561
    %v563 = vmul.f32 %v529, %v561
    %v564 = vmul.f32 %v530, %v561
    %v565 = vmul.f32 %v531, %v561
    %v566 = vmul.f32 %v532, %v561
    %v567 = vmul.f32 %v533, %v561
    %v568 = vmul.f32 %v534, %v561
    %v569 = vmul.f32 %v535, %v561
    %v570 = vstv %s77
    %v571 = vmul.f32 %v552, %v570
    %v572 = vmul.f32 %v553, %v570
    %v573 = vmul.f32 %v554, %v570
    %v574 = vmul.f32 %v555, %v570
    %v575 = vmul.f32 %v556, %v570
    %v576 = vmul.f32 %v557, %v570
    %v577 = vmul.f32 %v558, %v570
    %v578 = vmul.f32 %v559, %v570
    %v579 = vadd.f32 %v562, %v571
    %v580 = vadd.f32 %v563, %v572
    %v581 = vadd.f32 %v564, %v573
    %v582 = vadd.f32 %v565, %v574
    %v583 = vadd.f32 %v566, %v575
    %v584 = vadd.f32 %v567, %v576
    %v585 = vadd.f32 %v568, %v577
    %v586 = vadd.f32 %v569, %v578
    %v587 = vld [vmem:[#allocation9] sm:$0xff]
    %v588 = vld [vmem:[#allocation9 + $0x8] sm:$0xff]
    %v589 = vld [vmem:[#allocation9 + $0x10] sm:$0xff]
    %v590 = vld [vmem:[#allocation9 + $0x18] sm:$0xff]
    %v591 = vld [vmem:[#allocation9 + $0x20] sm:$0xff]
    %v592 = vld [vmem:[#allocation9 + $0x28] sm:$0xff]
    %v593 = vld [vmem:[#allocation9 + $0x30] sm:$0xff]
    %v594 = vld [vmem:[#allocation9 + $0x38] sm:$0xff]
    %v595 = vld [vmem:[#allocation9 + $0x40] sm:$0xff]
    %v596 = vld [vmem:[#allocation9 + $0x48] sm:$0xff]
    %v597 = vld [vmem:[#allocation9 + $0x50] sm:$0xff]
    %v598 = vld [vmem:[#allocation9 + $0x58] sm:$0xff]
    %v599 = vld [vmem:[#allocation9 + $0x60] sm:$0xff]
    %v600 = vld [vmem:[#allocation9 + $0x68] sm:$0xff]
    %v601 = vld [vmem:[#allocation9 + $0x70] sm:$0xff]
    %v602 = vld [vmem:[#allocation9 + $0x78] sm:$0xff]
    %603 = vmatprep.subr.mxu0 0.0
    %604 = vmatpush1.msra.mxu0 %v587
    %605 = vmatprep.subr.mxu0 0.0
    %606 = vmatpush1.msra.mxu0 %v588
    %607 = vmatprep.subr.mxu0 0.0
    %608 = vmatpush1.msra.mxu0 %v589
    %609 = vmatprep.subr.mxu0 0.0
    %610 = vmatpush1.msra.mxu0 %v590
    %611 = vmatprep.subr.mxu0 0.0
    %612 = vmatpush1.msra.mxu0 %v591
    %613 = vmatprep.subr.mxu0 0.0
    %614 = vmatpush1.msra.mxu0 %v592
    %615 = vmatprep.subr.mxu0 0.0
    %616 = vmatpush1.msra.mxu0 %v593
    %617 = vmatprep.subr.mxu0 0.0
    %618 = vmatpush1.msra.mxu0 %v594
    %619 = vmatprep.subr.mxu0 0.0
    %620 = vmatpush1.msra.mxu0 %v595
    %621 = vmatprep.subr.mxu0 0.0
    %622 = vmatpush1.msra.mxu0 %v596
    %623 = vmatprep.subr.mxu0 0.0
    %624 = vmatpush1.msra.mxu0 %v597
    %625 = vmatprep.subr.mxu0 0.0
    %626 = vmatpush1.msra.mxu0 %v598
    %627 = vmatprep.subr.mxu0 0.0
    %628 = vmatpush1.msra.mxu0 %v599
    %629 = vmatprep.subr.mxu0 0.0
    %630 = vmatpush1.msra.mxu0 %v600
    %631 = vmatprep.subr.mxu0 0.0
    %632 = vmatpush1.msra.mxu0 %v601
    %633 = vmatprep.subr.mxu0 0.0
    %634 = vmatpush1.msra.mxu0 %v602
    %635 = vmatprep.subr.mxu0 0.0
    %636 = vmatpush1.msra.mxu0 0.0
    %637 = vmatprep.subr.mxu0 0.0
    %638 = vmatpush1.msra.mxu0 0.0
    %639 = vmatprep.subr.mxu0 0.0
    %640 = vmatpush1.msra.mxu0 0.0
    %641 = vmatprep.subr.mxu0 0.0
    %642 = vmatpush1.msra.mxu0 0.0
    %643 = vmatprep.subr.mxu0 0.0
    %644 = vmatpush1.msra.mxu0 0.0
    %645 = vmatprep.subr.mxu0 0.0
    %646 = vmatpush1.msra.mxu0 0.0
    %647 = vmatprep.subr.mxu0 0.0
    %648 = vmatpush1.msra.mxu0 0.0
    %649 = vmatprep.subr.mxu0 0.0
    %650 = vmatpush1.msra.mxu0 0.0
    %651 = vmatprep.subr.mxu0 0.0
    %652 = vmatpush1.msra.mxu0 0.0
    %653 = vmatprep.subr.mxu0 0.0
    %654 = vmatpush1.msra.mxu0 0.0
    %655 = vmatprep.subr.mxu0 0.0
    %656 = vmatpush1.msra.mxu0 0.0
    %657 = vmatprep.subr.mxu0 0.0
    %658 = vmatpush1.msra.mxu0 0.0
    %659 = vmatprep.subr.mxu0 0.0
    %660 = vmatpush1.msra.mxu0 0.0
    %661 = vmatprep.subr.mxu0 0.0
    %662 = vmatpush1.msra.mxu0 0.0
    %663 = vmatprep.subr.mxu0 0.0
    %664 = vmatpush1.msra.mxu0 0.0
    %665 = vmatprep.subr.mxu0 0.0
    %666 = vmatpush1.msra.mxu0 0.0
    %667 = vmatprep.mubr.f32.mxu0 0.0
    %668 = vmatmul.mubr.f32.gmra.mrb[0].mxu0 %v579
    %v669 = vpop.f32.mrb[0].mxu0
    %v670 = vadd.f32 1e-05, %v669
    %v671 = vpop.f32.mrb[0].mxu0
    %672 = vmatprep.mubr.f32.mxu0 0.0
    %673 = vmatmul.mubr.f32.gmra.mrb[0].mxu0 %v580
    %v674 = vpop.f32.mrb[0].mxu0
    %v675 = vadd.f32 1e-05, %v674
    %v676 = vpop.f32.mrb[0].mxu0
    %677 = vmatprep.mubr.f32.mxu0 0.0
    %678 = vmatmul.mubr.f32.gmra.mrb[0].mxu0 %v581
    %v679 = vpop.f32.mrb[0].mxu0
    %v680 = vadd.f32 1e-05, %v679
    %v681 = vpop.f32.mrb[0].mxu0
    %682 = vmatprep.mubr.f32.mxu0 0.0
    %683 = vmatmul.mubr.f32.gmra.mrb[0].mxu0 %v582
    %v684 = vpop.f32.mrb[0].mxu0
    %v685 = vadd.f32 1e-05, %v684
    %v686 = vpop.f32.mrb[0].mxu0
    %687 = vmatprep.mubr.f32.mxu0 0.0
    %688 = vmatmul.mubr.f32.gmra.mrb[0].mxu0 %v583
    %v689 = vpop.f32.mrb[0].mxu0
    %v690 = vadd.f32 1e-05, %v689
    %v691 = vpop.f32.mrb[0].mxu0
    %692 = vmatprep.mubr.f32.mxu0 0.0
    %693 = vmatmul.mubr.f32.gmra.mrb[0].mxu0 %v584
    %v694 = vpop.f32.mrb[0].mxu0
    %v695 = vadd.f32 1e-05, %v694
    %v696 = vpop.f32.mrb[0].mxu0
    %697 = vmatprep.mubr.f32.mxu0 0.0
    %698 = vmatmul.mubr.f32.gmra.mrb[0].mxu0 %v585
    %v699 = vpop.f32.mrb[0].mxu0
    %v700 = vadd.f32 1e-05, %v699
    %v701 = vpop.f32.mrb[0].mxu0
    %702 = vmatprep.mubr.f32.mxu0 0.0
    %703 = vmatmul.mubr.f32.gmra.mrb[0].mxu0 %v586
    %v704 = vpop.f32.mrb[0].mxu0
    %v705 = vadd.f32 1e-05, %v704
    %v706 = vpop.f32.mrb[0].mxu0
    %707 = vdwg.mxu0
    %v708 = vlog2.pop %v670
    %v709 = vmul.f32 %v708, 0.6931472
    %v710 = vlog2.pop %v675
    %v711 = vmul.f32 %v710, 0.6931472
    %v712 = vlog2.pop %v680
    %v713 = vmul.f32 %v712, 0.6931472
    %v714 = vlog2.pop %v685
    %v715 = vmul.f32 %v714, 0.6931472
    %v716 = vlog2.pop %v690
    %v717 = vmul.f32 %v716, 0.6931472
    %v718 = vlog2.pop %v695
    %v719 = vmul.f32 %v718, 0.6931472
    %v720 = vlog2.pop %v700
    %v721 = vmul.f32 %v720, 0.6931472
    %v722 = vlog2.pop %v705
    %v723 = vmul.f32 %v722, 0.6931472
    %v724 = vadd.f32 %v709, 4.5
    %v725 = vadd.f32 %v711, 4.5
    %v726 = vadd.f32 %v713, 4.5
    %v727 = vadd.f32 %v715, 4.5
    %v728 = vadd.f32 %v717, 4.5
    %v729 = vadd.f32 %v719, 4.5
    %v730 = vadd.f32 %v721, 4.5
    %v731 = vadd.f32 %v723, 4.5
    %v732 = vrcp.pop 5.0
    %v733 = vmul.f32 %v724, %v732
    %v734 = vmul.f32 %v725, %v732
    %v735 = vmul.f32 %v726, %v732
    %v736 = vmul.f32 %v727, %v732
    %v737 = vmul.f32 %v728, %v732
    %v738 = vmul.f32 %v729, %v732
    %v739 = vmul.f32 %v730, %v732
    %v740 = vmul.f32 %v731, %v732
    %741 = vst [vmem:[#allocation11] sm:$0xff] %v733
    %742 = vst [vmem:[#allocation11 + $0x8] sm:$0xff] %v734
    %743 = vst [vmem:[#allocation11 + $0x10] sm:$0xff] %v735
    %744 = vst [vmem:[#allocation11 + $0x18] sm:$0xff] %v736
    %745 = vst [vmem:[#allocation11 + $0x20] sm:$0xff] %v737
    %746 = vst [vmem:[#allocation11 + $0x28] sm:$0xff] %v738
    %747 = vst [vmem:[#allocation11 + $0x30] sm:$0xff] %v739
    %748 = vst [vmem:[#allocation11 + $0x38] sm:$0xff] %v740
    // Predicated region
    $region38: #{tpu_custom_call.1} parent=1 // pred_check
      _
    $region39: #{tpu_custom_call.1} parent=1 // pred_check_branch
      %750 = sbr.rel (0) target = $region41
    $region40: #{tpu_custom_call.1} parent=1 // pred_region
      %s752 = ssub.s32 1024, 1024
      %753 = vsyncadd [#allocation5], %s752
      %s754 = sshll.u32 [#allocation11], 4
      %s755 = int_to_ptr.vmem [resolvable:$true] %s754
      %760 = dma.vmem_to_hbm [thread:$0]  %s755, 1024, %s5, [#allocation5], 128, 128, 8
    $region41: #{tpu_custom_call.1} parent=1 // pred_fallthru
      _
    // Predicated region
    $region42: #{tpu_custom_call.1} parent=1 // pred_check
      _
    $region43: #{tpu_custom_call.1} parent=1 // pred_check_branch
      %762 = sbr.rel (0) target = $region45
    $region44: #{tpu_custom_call.1} parent=1 // pred_region
      %763 = dma.done [#allocation5], 1024
    $region45: #{tpu_custom_call.1} parent=1 // pred_fallthru
      _
    %764 = vsyncpa [#allocation4], 1
    %765 = vsyncpa [#allocation7], 1
    %766 = vsyncpa [#allocation10], 1
    %767 = vsyncpa [#allocation5], 1

</llo_original>
